<compile_context>
chip_gen: v5e
topology: v5e:2x2
jax: 0.10.0
libtpu: 0.0.40
codegen_flags: <defaults>
</compile_context>

<pallas_src>
import functools
import math

import jax
import jax.numpy as jnp
from jax import lax
from jax.experimental import pallas as pl
from jax.experimental.pallas import tpu as pltpu


def _round_up(v, m):
    return ((v + m - 1) // m) * m


def _cdiv(a, b):
    return -(-a // b)


def _l2_normalize(v):
    # rsqrt goes to the EUP slot; numerically ~ torch F.normalize(eps=1e-12).
    return v * lax.rsqrt(jnp.maximum(jnp.sum(v * v, axis=-1, keepdims=True), 1e-24))


def _default_max_tile_b():
    """Per-generation default batch tile (W-reuse factor)."""
    try:
        kind = jax.devices()[0].device_kind.lower()
    except Exception:
        return 512
    if "v5 lite" in kind or "v5e" in kind or "v5lite" in kind:
        return 256    # v5e: ridge ~240 flops/byte, bigger tiles buy nothing
    if "v6" in kind:
        return 1024   # v6e: ridge ~680 flops/byte wants large W reuse
    return 512        # v7x & others: ridge ~300 flops/byte, save scarce VMEM


def _normalize_w_tile(w_ref, compute_dtype):
    # Fused per-row L2 norm of a raw f32 W tile; EUP rsqrt + VPU scale hide
    # under the MXU.  Garbage edge rows (partial blocks) are masked downstream.
    w = w_ref[...].astype(jnp.float32)
    inv = lax.rsqrt(jnp.maximum(jnp.sum(w * w, axis=-1, keepdims=True), 1e-24))
    return (w * inv).astype(compute_dtype)


def _arc_margin_kernel(x_ref, w_ref, label_ref, o_ref, *, s, cos_m, sin_m, th,
                       mm, easy_margin, tile_n, normalize_w, compute_dtype):
    j = pl.program_id(1)

    wt = _normalize_w_tile(w_ref, compute_dtype) if normalize_w else w_ref[...]

    # cosine = xn @ wn.T without materializing a transpose: contract last dims.
    cosine = lax.dot_general(
        x_ref[...], wt,
        dimension_numbers=(((1,), (1,)), ((), ())),
        preferred_element_type=jnp.float32)             # (TB, TN) f32

    tb, tn = cosine.shape
    label = label_ref[...]                               # (TB, 1) int32
    col_ids = j * tile_n + lax.broadcasted_iota(jnp.int32, (tb, tn), 1)
    mask = col_ids == label          # bool; labels < N so OOB edge cols never match

    # Per-row label cosine.  where-select (not one_hot multiply) keeps garbage /
    # NaN values from masked edge columns out of the reduction.
    cos_label = jnp.sum(jnp.where(mask, cosine, 0.0), axis=-1, keepdims=True)
    sine = jnp.sqrt(jnp.clip(1.0 - cos_label * cos_label, 0.0, 1.0))
    phi = cos_label * cos_m - sine * sin_m
    if easy_margin:
        phi = jnp.where(cos_label > 0.0, phi, cos_label)
    else:
        phi = jnp.where(cos_label > th, phi, cos_label - mm)

    o_ref[...] = (jnp.where(mask, phi, cosine) * s).astype(o_ref.dtype)


def _cosine_scale_kernel(x_ref, w_ref, o_ref, *, s, normalize_w, compute_dtype):
    wt = _normalize_w_tile(w_ref, compute_dtype) if normalize_w else w_ref[...]
    cosine = lax.dot_general(
        x_ref[...], wt,
        dimension_numbers=(((1,), (1,)), ((), ())),
        preferred_element_type=jnp.float32)
    o_ref[...] = (cosine * s).astype(o_ref.dtype)


def arc_margin_forward(x, weight, label, *, s, cos_m, sin_m, th, mm,
                       easy_margin, max_tile_b=None, max_tile_n=512,
                       compute_dtype=jnp.bfloat16, out_dtype=jnp.float32):
    B, D = x.shape
    N, D2 = weight.shape
    assert D == D2

    if max_tile_b is None:
        max_tile_b = _default_max_tile_b()
    max_tile_n = max(128, (max_tile_n // 128) * 128)

    # ---- tile selection: no padding / no output slice, cdiv grid with masked
    # partial edge blocks ----
    if B <= max_tile_b:
        tile_b = B                                    # full dim: always layout-legal
    else:
        tile_b = _round_up(_cdiv(B, _cdiv(B, max_tile_b)), 16)   # balanced tiles
    grid_b0 = _cdiv(B, tile_b)

    if N < 128:
        tile_n = N                                    # single lane-masked tile
    else:
        tile_n = min(max_tile_n, (N // 128) * 128)    # lane-dense
    # Megacore (v7x): if the batch axis is a single tile, keep >= 2 class tiles
    # so both TensorCores stream disjoint halves of W.
    if grid_b0 == 1 and tile_n == N and N >= 256 and N % 256 == 0:
        tile_n = N // 2

    # ---- operand prep.  x is normalized in the wrapper (small).  W
    # normalization is fused into the kernel whenever W is streamed at most
    # twice: one raw f32 stream beats f32-read + bf16-write + bf16 re-read. ----
    xn = _l2_normalize(x.astype(jnp.float32)).astype(compute_dtype)
    fuse_w_norm = grid_b0 <= 2
    if fuse_w_norm:
        w_in = weight.astype(jnp.float32)
        w_bytes = 4
    else:
        w_in = _l2_normalize(weight.astype(jnp.float32)).astype(compute_dtype)
        w_bytes = jnp.dtype(compute_dtype).itemsize

    x_bytes = jnp.dtype(compute_dtype).itemsize
    out_bytes = jnp.dtype(out_dtype).itemsize

    # ---- keep the double-buffered working set inside a cross-generation VMEM
    # budget (v7x: 64 MiB physical; v5e: 16 MiB default scoped limit). ----
    def _footprint(tb, tn):
        return (2 * (tb * D * x_bytes + tn * D * w_bytes + tb * tn * out_bytes)
                + 2 * tb * 4)

    VMEM_BUDGET = 40 << 20
    while _footprint(tile_b, tile_n) > VMEM_BUDGET and (tile_b > 128 or tile_n > 128):
        if tile_b >= tile_n and tile_b > 128:
            tile_b = max(128, _round_up(tile_b // 2, 16))
        else:
            tile_n = max(128, _round_up(tile_n // 2, 128))

    grid = (_cdiv(B, tile_b), _cdiv(N, tile_n))

    cost = pl.CostEstimate(
        flops=2 * B * N * D,
        transcendentals=B * grid[1] + (N * grid[0] if fuse_w_norm else 0),
        bytes_accessed=(B * D * x_bytes                  # x resident across j
                        + grid[0] * N * D * w_bytes      # W streamed once per batch tile
                        + B * N * out_bytes
                        + (B * 4 if label is not None else 0)))
    cparams = pltpu.CompilerParams(
        dimension_semantics=("parallel", "parallel"),
        vmem_limit_bytes=int(min(56 << 20,
                                 max(24 << 20, 2 * _footprint(tile_b, tile_n)))))

    in_specs = [
        pl.BlockSpec((tile_b, D), lambda i, j: (i, 0)),   # x tile (resident over j)
        pl.BlockSpec((tile_n, D), lambda i, j: (j, 0)),   # W tile (streamed)
    ]
    args = [xn, w_in]

    if label is not None:
        in_specs.append(pl.BlockSpec((tile_b, 1), lambda i, j: (i, 0)))
        args.append(label.reshape(B, 1).astype(jnp.int32))
        kernel = functools.partial(
            _arc_margin_kernel, s=s, cos_m=cos_m, sin_m=sin_m, th=th, mm=mm,
            easy_margin=easy_margin, tile_n=tile_n, normalize_w=fuse_w_norm,
            compute_dtype=compute_dtype)
    else:
        kernel = functools.partial(
            _cosine_scale_kernel, s=s, normalize_w=fuse_w_norm,
            compute_dtype=compute_dtype)

    return pl.pallas_call(
        kernel,
        out_shape=jax.ShapeDtypeStruct((B, N), out_dtype),
        grid=grid,
        in_specs=in_specs,
        out_specs=pl.BlockSpec((tile_b, tile_n), lambda i, j: (i, j)),
        compiler_params=cparams,
        cost_estimate=cost,
    )(*args)


class ArcMarginProductPallas:
    """JAX/Pallas port of the PyTorch ArcMarginProduct module (forward only)."""

    def __init__(self, in_features, out_features, s=30.0, m=0.5,
                 easy_margin=False, key=None, max_tile_b=None, max_tile_n=512,
                 out_dtype=jnp.float32):
        self.in_features = in_features
        self.out_features = out_features
        self.s = float(s)
        self.m = float(m)
        self.easy_margin = easy_margin
        self.cos_m = math.cos(m)
        self.sin_m = math.sin(m)
        self.th = math.cos(math.pi - m)
        self.mm = math.sin(math.pi - m) * m
        self.max_tile_b = max_tile_b
        self.max_tile_n = max_tile_n
        self.out_dtype = out_dtype

        # xavier_uniform_ init: U(-a, a), a = sqrt(6 / (fan_in + fan_out))
        if key is None:
            key = jax.random.PRNGKey(0)
        bound = math.sqrt(6.0 / (in_features + out_features))
        self.weight = jax.random.uniform(
            key, (out_features, in_features), dtype=jnp.float32,
            minval=-bound, maxval=bound)

    def __call__(self, x, label=None):
        return arc_margin_forward(
            x, self.weight, label, s=self.s, cos_m=self.cos_m, sin_m=self.sin_m,
            th=self.th, mm=self.mm, easy_margin=self.easy_margin,
            max_tile_b=self.max_tile_b, max_tile_n=self.max_tile_n,
            out_dtype=self.out_dtype)


def _reference(x, weight, label, s, m, easy_margin=False,
               compute_dtype=jnp.bfloat16):
    """Pure-JAX reference mirroring the PyTorch forward (same bf16 matmul path)."""
    cos_m, sin_m = math.cos(m), math.sin(m)
    th = math.cos(math.pi - m)
    mm = math.sin(math.pi - m) * m
    xn = _l2_normalize(x.astype(jnp.float32)).astype(compute_dtype)
    wn = _l2_normalize(weight.astype(jnp.float32)).astype(compute_dtype)
    cosine = jnp.dot(xn, wn.T, preferred_element_type=jnp.float32)
    if label is None:
        return cosine * s
    sine = jnp.sqrt(jnp.clip(1.0 - cosine ** 2, 0.0, 1.0))
    phi = cosine * cos_m - sine * sin_m
    if easy_margin:
        phi = jnp.where(cosine > 0, phi, cosine)
    else:
        phi = jnp.where(cosine > th, phi, cosine - mm)
    one_hot = jax.nn.one_hot(label, cosine.shape[1], dtype=cosine.dtype)
    return (one_hot * phi + (1.0 - one_hot) * cosine) * s


if __name__ == "__main__":
    key = jax.random.PRNGKey(0)
    keys = jax.random.split(key, 12)

    # --- test 1: tiny shapes, single tile, N < 128, fused in-kernel W-norm ---
    B1, D1, N1 = 8, 32, 16
    m1 = ArcMarginProductPallas(D1, N1, s=30.0, m=0.5, key=keys[0])
    x1 = jax.random.normal(keys[1], (B1, D1), dtype=jnp.float32)
    l1 = jax.random.randint(keys[2], (B1,), 0, N1, dtype=jnp.int32)
    o1 = jax.block_until_ready(m1(x1, l1))
    r1 = _reference(x1, m1.weight, l1, s=30.0, m=0.5)
    assert o1.shape == (B1, N1)
    assert jnp.allclose(o1, r1, atol=2e-3, rtol=1e-3), "mismatch (test 1)"

    o1n = jax.block_until_ready(m1(x1, None))
    r1n = _reference(x1, m1.weight, None, s=30.0, m=0.5)
    assert jnp.allclose(o1n, r1n, atol=2e-3, rtol=1e-3), "mismatch (no-label)"

    # --- test 2: N not a multiple of 128 -> masked partial edge tile over classes ---
    B2, D2, N2 = 40, 64, 333
    m2 = ArcMarginProductPallas(D2, N2, s=30.0, m=0.5, key=keys[3])
    x2 = jax.random.normal(keys[4], (B2, D2), dtype=jnp.float32)
    l2 = jax.random.randint(keys[5], (B2,), 0, N2, dtype=jnp.int32)
    o2 = jax.block_until_ready(m2(x2, l2))
    r2 = _reference(x2, m2.weight, l2, s=30.0, m=0.5)
    assert o2.shape == (B2, N2)
    assert jnp.allclose(o2, r2, atol=2e-3, rtol=1e-3), "mismatch (test 2)"

    # --- test 3: multi-tile on both axes, partial edges, unfused (wrapper) W-norm ---
    B3, D3, N3 = 72, 64, 280
    m3 = ArcMarginProductPallas(D3, N3, s=30.0, m=0.5, key=keys[6],
                                max_tile_b=32, max_tile_n=128)
    x3 = jax.random.normal(keys[7], (B3, D3), dtype=jnp.float32)
    l3 = jax.random.randint(keys[8], (B3,), 0, N3, dtype=jnp.int32)
    o3 = jax.block_until_ready(m3(x3, l3))
    r3 = _reference(x3, m3.weight, l3, s=30.0, m=0.5)
    assert o3.shape == (B3, N3)
    assert jnp.allclose(o3, r3, atol=2e-3, rtol=1e-3), "mismatch (test 3)"

    # --- test 4: grid_b == 1, N multiple of 256 -> class axis split for megacore ---
    B4, D4, N4 = 16, 64, 512
    m4 = ArcMarginProductPallas(D4, N4, s=30.0, m=0.5, easy_margin=True, key=keys[9])
    x4 = jax.random.normal(keys[10], (B4, D4), dtype=jnp.float32)
    l4 = jax.random.randint(keys[11], (B4,), 0, N4, dtype=jnp.int32)
    o4 = jax.block_until_ready(m4(x4, l4))
    r4 = _reference(x4, m4.weight, l4, s=30.0, m=0.5, easy_margin=True)
    assert jnp.allclose(o4, r4, atol=2e-3, rtol=1e-3), "mismatch (test 4)"

    print("KERNEL_OK")
</pallas_src>

<mosaic_0001>
module attributes {stable_mosaic.version = 11 : i64} {
  func.func @_arc_margin_kernel(%arg0: i32, %arg1: i32, %arg2: memref<8x32xbf16, #tpu.memory_space<vmem>>, %arg3: memref<16x32xf32, #tpu.memory_space<vmem>>, %arg4: memref<8x1xi32, #tpu.memory_space<vmem>>, %arg5: memref<8x16xf32, #tpu.memory_space<vmem>>) attributes {dimension_semantics = [#tpu.dimension_semantics<parallel>, #tpu.dimension_semantics<parallel>], iteration_bounds = array<i64: 1, 1>, scalar_prefetch = 0 : i64, scratch_operands = 0 : i64, tpu.core_type = #tpu.core_type<tc>, window_params = [{transform_indices = @transform_0, window_bounds = array<i64: 8, 32>}, {transform_indices = @transform_1, window_bounds = array<i64: 16, 32>}, {transform_indices = @transform_2, window_bounds = array<i64: 8, 1>}, {transform_indices = @transform_3, window_bounds = array<i64: 8, 16>}]} {
    %c0 = arith.constant 0 : index
    %c0_0 = arith.constant 0 : index
    %0 = vector.load %arg3[%c0, %c0_0] : memref<16x32xf32, #tpu.memory_space<vmem>>, vector<16x32xf32>
    %1 = arith.mulf %0, %0 : vector<16x32xf32>
    %cst = arith.constant dense<0.000000e+00> : vector<16xf32>
    %2 = vector.multi_reduction <add>, %1, %cst [1] : vector<16x32xf32> to vector<16xf32>
    %3 = vector.shape_cast %2 : vector<16xf32> to vector<16x1xf32>
    %cst_1 = arith.constant 1.000000e-24 : f32
    %4 = vector.broadcast %cst_1 : f32 to vector<16x1xf32>
    %5 = arith.maximumf %3, %4 : vector<16x1xf32>
    %6 = math.rsqrt %5 : vector<16x1xf32>
    %7 = vector.broadcast %6 : vector<16x1xf32> to vector<16x32xf32>
    %8 = arith.mulf %0, %7 : vector<16x32xf32>
    %9 = arith.truncf %8 : vector<16x32xf32> to vector<16x32xbf16>
    %c0_2 = arith.constant 0 : index
    %c0_3 = arith.constant 0 : index
    %10 = vector.load %arg2[%c0_2, %c0_3] : memref<8x32xbf16, #tpu.memory_space<vmem>>, vector<8x32xbf16>
    %cst_4 = arith.constant dense<0.000000e+00> : vector<8x16xf32>
    %11 = tpu.matmul %10, %9, %cst_4 {dimension_numbers = #tpu.dot_dimension_numbers<[1], [1], [0], [0], [0, 0, 1, 0], [], []>} : vector<8x32xbf16>, vector<16x32xbf16>, vector<8x16xf32> -> vector<8x16xf32>
    %c0_5 = arith.constant 0 : index
    %c0_6 = arith.constant 0 : index
    %12 = vector.load %arg4[%c0_5, %c0_6] : memref<8x1xi32, #tpu.memory_space<vmem>>, vector<8x1xi32>
    %c16_i32 = arith.constant 16 : i32
    %13 = arith.muli %arg1, %c16_i32 : i32
    %14 = tpu.iota {dimensions = array<i32: 1>} : vector<8x16xi32>
    %15 = vector.broadcast %13 : i32 to vector<8x16xi32>
    %16 = arith.addi %15, %14 : vector<8x16xi32>
    %17 = vector.broadcast %12 : vector<8x1xi32> to vector<8x16xi32>
    %18 = arith.cmpi eq, %16, %17 : vector<8x16xi32>
    %cst_7 = arith.constant 0.000000e+00 : f32
    %19 = vector.broadcast %cst_7 : f32 to vector<8x16xf32>
    %20 = arith.select %18, %11, %19 : vector<8x16xi1>, vector<8x16xf32>
    %cst_8 = arith.constant dense<0.000000e+00> : vector<8xf32>
    %21 = vector.multi_reduction <add>, %20, %cst_8 [1] : vector<8x16xf32> to vector<8xf32>
    %22 = vector.shape_cast %21 : vector<8xf32> to vector<8x1xf32>
    %23 = arith.mulf %22, %22 : vector<8x1xf32>
    %cst_9 = arith.constant 1.000000e+00 : f32
    %24 = vector.broadcast %cst_9 : f32 to vector<8x1xf32>
    %25 = arith.subf %24, %23 : vector<8x1xf32>
    %cst_10 = arith.constant 0.000000e+00 : f32
    %cst_11 = arith.constant 1.000000e+00 : f32
    %26 = vector.broadcast %cst_10 : f32 to vector<8x1xf32>
    %27 = arith.maximumf %26, %25 : vector<8x1xf32>
    %28 = vector.broadcast %cst_11 : f32 to vector<8x1xf32>
    %29 = arith.minimumf %28, %27 : vector<8x1xf32>
    %30 = math.sqrt %29 : vector<8x1xf32>
    %cst_12 = arith.constant 0.87758255 : f32
    %31 = vector.broadcast %cst_12 : f32 to vector<8x1xf32>
    %32 = arith.mulf %22, %31 : vector<8x1xf32>
    %cst_13 = arith.constant 0.47942555 : f32
    %33 = vector.broadcast %cst_13 : f32 to vector<8x1xf32>
    %34 = arith.mulf %30, %33 : vector<8x1xf32>
    %35 = arith.subf %32, %34 : vector<8x1xf32>
    %cst_14 = arith.constant -0.87758255 : f32
    %36 = vector.broadcast %cst_14 : f32 to vector<8x1xf32>
    %37 = arith.cmpf ogt, %22, %36 : vector<8x1xf32>
    %cst_15 = arith.constant 0.239712775 : f32
    %38 = vector.broadcast %cst_15 : f32 to vector<8x1xf32>
    %39 = arith.subf %22, %38 : vector<8x1xf32>
    %40 = arith.select %37, %35, %39 : vector<8x1xi1>, vector<8x1xf32>
    %41 = vector.shape_cast %40 : vector<8x1xf32> to vector<8x1xf32>
    %42 = vector.broadcast %41 : vector<8x1xf32> to vector<8x16xf32>
    %43 = arith.select %18, %42, %11 : vector<8x16xi1>, vector<8x16xf32>
    %cst_16 = arith.constant 3.000000e+01 : f32
    %44 = vector.broadcast %cst_16 : f32 to vector<8x16xf32>
    %45 = arith.mulf %43, %44 : vector<8x16xf32>
    %c0_17 = arith.constant 0 : index
    %c0_18 = arith.constant 0 : index
    %46 = vector.load %arg5[%c0_17, %c0_18] : memref<8x16xf32, #tpu.memory_space<vmem>>, vector<8x16xf32>
    tpu.vector_store %arg5[%c0_17, %c0_18], %45 {strides = array<i32>} : memref<8x16xf32, #tpu.memory_space<vmem>>, vector<8x16xf32>,
    return
  }
  func.func @transform_0(%arg0: i32, %arg1: i32) -> (i32, i32) {
    %c0_i32 = arith.constant 0 : i32
    %c0_i32_0 = arith.constant 0 : i32
    return %arg0, %c0_i32 : i32, i32
  }
  func.func @transform_1(%arg0: i32, %arg1: i32) -> (i32, i32) {
    %c0_i32 = arith.constant 0 : i32
    %c0_i32_0 = arith.constant 0 : i32
    return %arg1, %c0_i32 : i32, i32
  }
  func.func @transform_2(%arg0: i32, %arg1: i32) -> (i32, i32) {
    %c0_i32 = arith.constant 0 : i32
    %c0_i32_0 = arith.constant 0 : i32
    return %arg0, %c0_i32 : i32, i32
  }
  func.func @transform_3(%arg0: i32, %arg1: i32) -> (i32, i32) {
    %c0_i32 = arith.constant 0 : i32
    return %arg0, %arg1 : i32, i32
  }
}

</mosaic_0001>

<llo_original>
// kernel: tpu_custom_call.1
$region0: #{tpu_custom_call.1}
  #allocation0 [shape = 'u32[]', space=smem, size = 0x4, offset = 0x4, fixed_abs, tag = 'smem constant byte address 0x4 - core index']
  #allocation1 [shape = 'u32[72,128]{1,0:T(1,128)}', space=vmem, size = 0x9000, scoped, tag = 'internal scratch']
  %s0 = inlined_call_operand.vmem [shape: bf16[8,32], index: 0, kind: input, shape index: {}]
  %s1 = inlined_call_operand.hbm [shape: f32[16,32], index: 1, kind: input, shape index: {}]
  %s2 = inlined_call_operand.vmem [shape: s32[8,1], index: 2, kind: input, shape index: {}]
  %s3 = inlined_call_operand.hbm [shape: f32[8,16], index: 3, kind: output, shape index: {}]
  %s4 = sld [smem:[#allocation0]]
  $region26: #{tpu_custom_call.1} parent=0
    _
  %s6 = ssub.s32 1, %s4
  %s7 = scalar_select 0, %s6, %s4
  $region1: #{tpu_custom_call.1} parent=0
    #allocation2 [shape = 'u8[8192]{0}', space=vmem, size = 0x2000, scoped, tag = 'input window, operand 1, single buffered']
    #allocation3 [shape = 's32[1]{0}', space=sflag, size = 0x4, scoped, tag = 'scoped memory for tpu_custom_call.1']
    #allocation4 [shape = 's32[1]{0}', space=sflag, size = 0x4, scoped, tag = 'scoped memory for tpu_custom_call.1']
    #allocation5 [shape = 'u8[4096]{0}', space=vmem, size = 0x1000, scoped, tag = 'output window, operand 0, single buffered']
    %8 = vsyncpa [#allocation3], 0
    %9 = vsyncpa [#allocation4], 0
    // Predicated region
    $region2: #{tpu_custom_call.1} parent=1 // pred_check
      _
    $region3: #{tpu_custom_call.1} parent=1 // pred_check_branch
      %11 = sbr.rel (0) target = $region5
    $region4: #{tpu_custom_call.1} parent=1 // pred_region
      _
    $region5: #{tpu_custom_call.1} parent=1 // pred_fallthru
      _
    // Predicated region
    $region6: #{tpu_custom_call.1} parent=1 // pred_check
      _
    $region7: #{tpu_custom_call.1} parent=1 // pred_check_branch
      %13 = sbr.rel (0) target = $region9
    $region8: #{tpu_custom_call.1} parent=1 // pred_region
      %15 = vsyncadd [#allocation3], 0
      %s16 = sshll.u32 %s1, 4
      %s17 = int_to_ptr.hbm [resolvable:$true] %s16
      %s18 = sshll.u32 [#allocation2], 4
      %s19 = int_to_ptr.vmem [resolvable:$true] %s18
      %24 = dma.hbm_to_vmem [thread:$0]  %s17, 256, %s19, [#allocation3], 128, 128, 8
    $region9: #{tpu_custom_call.1} parent=1 // pred_fallthru
      _
    // Predicated region
    $region10: #{tpu_custom_call.1} parent=1 // pred_check
      _
    $region11: #{tpu_custom_call.1} parent=1 // pred_check_branch
      %26 = sbr.rel (0) target = $region13
    $region12: #{tpu_custom_call.1} parent=1 // pred_region
      _
    $region13: #{tpu_custom_call.1} parent=1 // pred_fallthru
      _
    // Predicated region
    $region14: #{tpu_custom_call.1} parent=1 // pred_check
      _
    $region15: #{tpu_custom_call.1} parent=1 // pred_check_branch
      %28 = sbr.rel (0) target = $region17
    $region16: #{tpu_custom_call.1} parent=1 // pred_region
      %30 = dma.done [#allocation3], 256
    $region17: #{tpu_custom_call.1} parent=1 // pred_fallthru
      _
    %v32 = vld [vmem:[#allocation2] sm:$0xff]
    %v33 = vld [vmem:[#allocation2 + $0x8] sm:$0xff]
    %v34 = vmul.f32 %v32, %v32
    %v35 = vmul.f32 %v33, %v33
    %vm36 = vcmask 261120
    %v37 = vsel %vm36, %v34, 0.0
    %38 = vadd.xlane.f32.xlu0 %v37
    %v39 = vpop.xlane.xlu0 %38
    %v40 = vsel %vm36, %v35, 0.0
    %41 = vadd.xlane.f32.xlu0 %v40
    %v42 = vpop.xlane.xlu0 %41
    %v43 = vmax.f32 %v39, 1e-24
    %v44 = vmax.f32 %v42, 1e-24
    %v45 = vrsqrt.pop %v43
    %v46 = vmul.f32 %v45, %v43
    %v47 = vmul.f32 %v46, %v45
    %v48 = vmul.f32 0.5, %v47
    %v49 = vsub.f32 1.5, %v48
    %v50 = vmul.f32 %v45, %v49
    %vm51 = vweird.f32 %v43
    %vm52 = vweird.f32 %v45
    %vm53 = vmor %vm51, %vm52
    %v54 = vsel %vm53, %v45, %v50
    %v55 = vrsqrt.pop %v44
    %v56 = vmul.f32 %v55, %v44
    %v57 = vmul.f32 %v56, %v55
    %v58 = vmul.f32 0.5, %v57
    %v59 = vsub.f32 1.5, %v58
    %v60 = vmul.f32 %v55, %v59
    %vm61 = vweird.f32 %v44
    %vm62 = vweird.f32 %v55
    %vm63 = vmor %vm61, %vm62
    %v64 = vsel %vm63, %v55, %v60
    %v65 = vmul.f32 %v32, %v54
    %v66 = vmul.f32 %v33, %v64
    %v67 = vpack.c.bf16 %v66, %v65
    %v68 = vld [vmem:[%s0] sm:$0xf]
    %v70 = vsel %vm36, %v68, 0
    %v73 = vsel %vm36, %v67, 0
    %75 = vmatpush.bf16.xpose.msra.mxu0 0
    %76 = vmatpush.bf16.xpose.msra.mxu0 0
    %77 = vmatpush.bf16.xpose.msra.mxu0 0
    %78 = vmatpush.bf16.xpose.msra.mxu0 0
    %79 = vmatpush.bf16.xpose.msra.mxu0 0
    %80 = vmatpush.bf16.xpose.msra.mxu0 0
    %81 = vmatpush.bf16.xpose.msra.mxu0 0
    %82 = vmatpush.bf16.xpose.msra.mxu0 %v73
    %83 = vmatmul.bf16.gmra.mxu0 %v70
    %v84 = vpop.f32.mrf.mxu0
    %v85 = vadd.f32 0.0, %v84
    %v86 = vpop.f32.mrf.mxu0
    %87 = vdwg.mxu0
    %v88 = vld [vmem:[%s2] sm:$0xff]
    %s89 = smul.u32 0, 16
    %v90 = vlaneseq
    %v91 = vand.u32 %v90, 127
    %v92 = vstv %s89
    %v93 = vadd.s32 %v92, %v91
    %94 = vset.pattern.permute.xlu0 0
    %95 = vperm.xlu0 %94, %v88
    %v96 = vpop.permute.xlu0 %95
    %vm97 = vcmp.eq.s32.totalorder %v93, %v96
    %v98 = vsel %vm97, %v85, 0.0
    %vm99 = vcmask 130048
    %v100 = vsel %vm99, %v98, 0.0
    %101 = vadd.xlane.f32.xlu0 %v100
    %v102 = vpop.xlane.xlu0 %101
    %v103 = vmul.f32 %v102, %v102
    %v104 = vsub.f32 1.0, %v103
    %v105 = vmax.f32 %v104, 0.0
    %v106 = vmin.f32 %v105, 1.0
    %v107 = vrsqrt.pop %v106
    %v108 = vmul.f32 %v107, %v106
    %v109 = vmul.f32 %v108, %v107
    %v110 = vmul.f32 0.5, %v109
    %v111 = vsub.f32 1.5, %v110
    %v112 = vmul.f32 %v107, %v111
    %v113 = vmul.f32 %v106, %v112
    %vm114 = vcmp.eq.f32.partialorder %v106, inf
    %v115 = vsel %vm114, %v106, %v113
    %vm116 = vcmp.eq.f32.partialorder %v106, 0.0
    %v117 = vand.u32 %v106, 2147483648
    %v118 = vsel %vm116, %v117, %v115
    %v119 = vmul.f32 %v102, 0.87758255
    %v120 = vmul.f32 %v118, 0.47942555
    %v121 = vsub.f32 %v119, %v120
    %vm122 = vcmp.gt.f32.partialorder %v102, -0.87758255
    %v123 = vsub.f32 %v102, 0.23971277
    %v124 = vsel %vm122, %v121, %v123
    %v125 = vsel %vm97, %v124, %v85
    %v126 = vmul.f32 %v125, 30.0
    %127 = vst.msk [vmem:[#allocation5] sm:$0xff] %vm99, %v126
    // Predicated region
    $region18: #{tpu_custom_call.1} parent=1 // pred_check
      _
    $region19: #{tpu_custom_call.1} parent=1 // pred_check_branch
      %129 = sbr.rel (0) target = $region21
    $region20: #{tpu_custom_call.1} parent=1 // pred_region
      %131 = vsyncadd [#allocation4], 0
      %s133 = sshll.u32 [#allocation5], 4
      %s134 = int_to_ptr.vmem [resolvable:$true] %s133
      %s135 = sshll.u32 %s3, 4
      %s136 = int_to_ptr.hbm [resolvable:$true] %s135
      %138 = dma.vmem_to_hbm [thread:$0]  %s134, 128, %s136, [#allocation4]
    $region21: #{tpu_custom_call.1} parent=1 // pred_fallthru
      _
    // Predicated region
    $region22: #{tpu_custom_call.1} parent=1 // pred_check
      _
    $region23: #{tpu_custom_call.1} parent=1 // pred_check_branch
      %140 = sbr.rel (0) target = $region25
    $region24: #{tpu_custom_call.1} parent=1 // pred_region
      %142 = dma.done [#allocation4], 128
    $region25: #{tpu_custom_call.1} parent=1 // pred_fallthru
      _
    %143 = vsyncpa [#allocation3], 1
    %144 = vsyncpa [#allocation4], 1

</llo_original>
